<compile_context>
chip_gen: v6e
topology: v6e:2x2x1
jax: 0.10.0
libtpu: 0.0.40
codegen_flags: <defaults>
</compile_context>

<pallas_src>
import functools

import jax
import jax.numpy as jnp
from jax.experimental import pallas as pl
from jax.experimental.pallas import tpu as pltpu

_TM_CAP = 2048  # max row tile; (2048, 512) f32 out double-buffered ~ 10 MiB


def _patch_embed_kernel(x_ref, w_ref, b_ref, o_ref, *, compute_dtype):
    # x_ref: (tm, P) f32 patch rows, w_ref: (P, E) compute_dtype,
    # b_ref: (1, E) f32, o_ref: (tm, E).
    # Cast x to the MXU streaming dtype in-kernel (VPU cast hides under DMA),
    # accumulate in f32, add bias in f32, cast once on store.
    xb = x_ref[...].astype(compute_dtype)
    acc = jnp.dot(xb, w_ref[...], preferred_element_type=jnp.float32)
    o_ref[...] = (acc + b_ref[...]).astype(o_ref.dtype)


def _num_tensorcores() -> int:
    """Best-effort TensorCore-per-chip count (megacore detection)."""
    try:
        kind = jax.devices()[0].device_kind.lower()
    except Exception:  # pragma: no cover - defensive
        return 1
    # v4 / v5p are megacore (2 TCs); v7x has 2 TCs per chip. v5e/v6e have 1.
    if "v4" in kind or "v5p" in kind or "v5 p" in kind or "v7" in kind:
        return 2
    return 1


def _pick_row_tile(M: int, num_cores: int) -> int:
    """Pick the row tile tm.

    - Tiny problems, or moderate problems on a single-TC chip: one grid step
      (block == full array is always a legal block shape; extra steps are pure
      per-step overhead when the grid is a serial loop).
    - 2-TC chips: an even number of grid steps (>= 2), each tile a multiple of
      8 rows and <= _TM_CAP, so the 'parallel' axis shards evenly across both
      TensorCores.
    - Large problems on a single-TC chip: _TM_CAP-row tiles.
    """
    if M <= 512 or (num_cores <= 1 and M <= _TM_CAP):
        return M
    if num_cores <= 1:
        return _TM_CAP
    steps = max(2, pl.cdiv(M, _TM_CAP))
    if steps % 2:
        steps += 1
    tm = ((pl.cdiv(M, steps) + 7) // 8) * 8  # multiple of 8, <= _TM_CAP
    return tm if tm < M else M


def patch_embed(x, conv_weight, conv_bias, patch_size, *,
                compute_dtype=jnp.bfloat16, out_dtype=None):
    """Forward pass of PatchEmbed.

    Args:
      x: (B, C, T) float32 EEG signal.
      conv_weight: (E, 1, 1, P) Conv2d weight (PyTorch layout).
      conv_bias: (E,) Conv2d bias.
      patch_size: P, patch length in samples (T % P == 0).
      compute_dtype: dtype used to stream x / W into the MXU (accumulation is
        always f32). Pass jnp.float32 for a bit-exact precision contract.
      out_dtype: output dtype; defaults to x.dtype (module-faithful). Pass
        jnp.bfloat16 to halve output HBM traffic if downstream tolerates it.

    Returns:
      (B, C * (T // P), E) embeddings, matching the PyTorch module.
    """
    B, C, T = x.shape
    P = patch_size
    assert T % P == 0, "time dimension must be divisible by patch_size"
    n_patches = T // P
    E = conv_weight.shape[0]
    if out_dtype is None:
        out_dtype = x.dtype

    # Glue: non-overlapping patches -> (M, P); row-major reshape only (free).
    M = B * C * n_patches
    x_patches = x.reshape(M, P)  # stays f32; cast happens inside the kernel
    # Conv weight (E,1,1,P) -> dense projection matrix (P, E); tiny, resident.
    w = jnp.transpose(conv_weight.reshape(E, P), (1, 0)).astype(compute_dtype)
    bias = conv_bias.reshape(1, E).astype(jnp.float32)

    tm = _pick_row_tile(M, _num_tensorcores())
    grid = (pl.cdiv(M, tm),)  # last block may be ragged; rows are independent

    in_x_bytes = x_patches.dtype.itemsize
    w_bytes = jnp.dtype(compute_dtype).itemsize
    out_bytes = jnp.dtype(out_dtype).itemsize
    cost = pl.CostEstimate(
        flops=2 * M * P * E,
        transcendentals=0,
        bytes_accessed=(M * P * in_x_bytes      # x patches (f32, read once)
                        + P * E * w_bytes       # weight
                        + E * 4                 # bias
                        + M * E * out_bytes),   # output
    )

    kernel = functools.partial(_patch_embed_kernel, compute_dtype=compute_dtype)

    out = pl.pallas_call(
        kernel,
        out_shape=jax.ShapeDtypeStruct((M, E), out_dtype),
        grid_spec=pltpu.PrefetchScalarGridSpec(
            num_scalar_prefetch=0,
            grid=grid,
            in_specs=[
                pl.BlockSpec((tm, P), lambda i: (i, 0)),   # patch rows (f32)
                pl.BlockSpec((P, E), lambda i: (0, 0)),    # projection weight
                pl.BlockSpec((1, E), lambda i: (0, 0)),    # bias
            ],
            out_specs=pl.BlockSpec((tm, E), lambda i: (i, 0)),
        ),
        compiler_params=pltpu.CompilerParams(
            dimension_semantics=("parallel",)),
        cost_estimate=cost,
    )(x_patches, w, bias)

    return out.reshape(B, C * n_patches, E)


def _reference(x, conv_weight, conv_bias, P):
    """Pure f32 JAX reference of the conv-as-matmul semantics."""
    B, C, T = x.shape
    E = conv_weight.shape[0]
    w = jnp.transpose(conv_weight.reshape(E, P), (1, 0))
    return (x.reshape(B, C, T // P, P) @ w + conv_bias).reshape(
        B, C * (T // P), E)


if __name__ == "__main__":
    key = jax.random.PRNGKey(0)

    # --- Small, module-consistent shapes: img_size=[C, T]=[4, 256],
    #     patch_size=64, in_chans=1, embed_dim=128 -> num_patches=(4, 4). ---
    B, C, T, P, E = 2, 4, 256, 64, 128
    kx, kw, kb, kx2, kx3 = jax.random.split(key, 5)
    x = jax.random.normal(kx, (B, C, T), dtype=jnp.float32)
    conv_weight = jax.random.normal(kw, (E, 1, 1, P), dtype=jnp.float32) * 0.02
    conv_bias = jax.random.normal(kb, (E,), dtype=jnp.float32) * 0.02

    out = jax.block_until_ready(patch_embed(x, conv_weight, conv_bias, P))
    assert out.shape == (B, C * (T // P), E)
    ref = _reference(x, conv_weight, conv_bias, P)
    # bf16-streamed inputs with f32 accumulation vs pure-f32 reference.
    assert jnp.allclose(out, ref, atol=3e-2, rtol=3e-2)

    # --- Second check: M = 2*13*25 = 650 (single block on 1-TC chips,
    #     2 balanced ragged blocks on 2-TC chips). ---
    B2, C2, T2 = 2, 13, 1600
    x2 = jax.random.normal(kx2, (B2, C2, T2), dtype=jnp.float32)
    out2 = jax.block_until_ready(patch_embed(x2, conv_weight, conv_bias, P))
    assert out2.shape == (B2, C2 * (T2 // P), E)
    ref2 = _reference(x2, conv_weight, conv_bias, P)
    assert jnp.allclose(out2, ref2, atol=3e-2, rtol=3e-2)

    # --- Third check: M = 3*30*25 = 2250 > tile cap, exercising the
    #     multi-step grid with a ragged final block on every core count. ---
    B3, C3, T3 = 3, 30, 1600
    x3 = jax.random.normal(kx3, (B3, C3, T3), dtype=jnp.float32)
    out3 = jax.block_until_ready(patch_embed(x3, conv_weight, conv_bias, P))
    assert out3.shape == (B3, C3 * (T3 // P), E)
    ref3 = _reference(x3, conv_weight, conv_bias, P)
    assert jnp.allclose(out3, ref3, atol=3e-2, rtol=3e-2)

    print("KERNEL_OK")
</pallas_src>

<mosaic_0001>
module attributes {stable_mosaic.version = 11 : i64} {
  func.func @_patch_embed_kernel(%arg0: i32, %arg1: memref<32x64xf32, #tpu.memory_space<vmem>>, %arg2: memref<64x128xbf16, #tpu.memory_space<vmem>>, %arg3: memref<1x128xf32, #tpu.memory_space<vmem>>, %arg4: memref<32x128xf32, #tpu.memory_space<vmem>>) attributes {dimension_semantics = [#tpu.dimension_semantics<parallel>], iteration_bounds = array<i64: 1>, scalar_prefetch = 0 : i64, scratch_operands = 0 : i64, tpu.core_type = #tpu.core_type<tc>, window_params = [{transform_indices = @transform_0, window_bounds = array<i64: 32, 64>}, {pipeline_mode = #tpu.pipeline_mode<synchronous>, transform_indices = @transform_1, window_bounds = array<i64: 64, 128>}, {pipeline_mode = #tpu.pipeline_mode<synchronous>, transform_indices = @transform_2, window_bounds = array<i64: 1, 128>}, {transform_indices = @transform_3, window_bounds = array<i64: 32, 128>}]} {
    %c0 = arith.constant 0 : index
    %c0_0 = arith.constant 0 : index
    %0 = vector.load %arg1[%c0, %c0_0] : memref<32x64xf32, #tpu.memory_space<vmem>>, vector<32x64xf32>
    %1 = arith.truncf %0 : vector<32x64xf32> to vector<32x64xbf16>
    %c0_1 = arith.constant 0 : index
    %c0_2 = arith.constant 0 : index
    %2 = vector.load %arg2[%c0_1, %c0_2] : memref<64x128xbf16, #tpu.memory_space<vmem>>, vector<64x128xbf16>
    %cst = arith.constant dense<0.000000e+00> : vector<32x128xf32>
    %3 = tpu.matmul %1, %2, %cst {dimension_numbers = #tpu.dot_dimension_numbers<[1], [0], [0], [1], [0, 0, 1, 1], [], []>} : vector<32x64xbf16>, vector<64x128xbf16>, vector<32x128xf32> -> vector<32x128xf32>
    %c0_3 = arith.constant 0 : index
    %c0_4 = arith.constant 0 : index
    %4 = vector.load %arg3[%c0_3, %c0_4] : memref<1x128xf32, #tpu.memory_space<vmem>>, vector<1x128xf32>
    %5 = vector.broadcast %4 : vector<1x128xf32> to vector<32x128xf32>
    %6 = arith.addf %3, %5 : vector<32x128xf32>
    %c0_5 = arith.constant 0 : index
    %c0_6 = arith.constant 0 : index
    %7 = vector.load %arg4[%c0_5, %c0_6] : memref<32x128xf32, #tpu.memory_space<vmem>>, vector<32x128xf32>
    tpu.vector_store %arg4[%c0_5, %c0_6], %6 {strides = array<i32>} : memref<32x128xf32, #tpu.memory_space<vmem>>, vector<32x128xf32>,
    return
  }
  func.func @transform_0(%arg0: i32) -> (i32, i32) {
    %c0_i32 = arith.constant 0 : i32
    %c0_i32_0 = arith.constant 0 : i32
    return %arg0, %c0_i32 : i32, i32
  }
  func.func @transform_1(%arg0: i32) -> (i32, i32) {
    %c0_i32 = arith.constant 0 : i32
    %c0_i32_0 = arith.constant 0 : i32
    %c0_i32_1 = arith.constant 0 : i32
    return %c0_i32, %c0_i32_0 : i32, i32
  }
  func.func @transform_2(%arg0: i32) -> (i32, i32) {
    %c0_i32 = arith.constant 0 : i32
    %c0_i32_0 = arith.constant 0 : i32
    %c0_i32_1 = arith.constant 0 : i32
    return %c0_i32, %c0_i32_0 : i32, i32
  }
  func.func @transform_3(%arg0: i32) -> (i32, i32) {
    %c0_i32 = arith.constant 0 : i32
    %c0_i32_0 = arith.constant 0 : i32
    return %arg0, %c0_i32 : i32, i32
  }
}

</mosaic_0001>

<llo_original>
// kernel: tpu_custom_call.1
$region0: #{tpu_custom_call.1}
  #allocation0 [shape = 'u32[]', space=smem, size = 0x4, offset = 0x4, fixed_abs, tag = 'smem constant byte address 0x4 - core index']
  #allocation1 [shape = 'u32[144,128]{1,0:T(1,128)}', space=vmem, size = 0x12000, scoped, tag = 'internal scratch']
  %s0 = inlined_call_operand.hbm [shape: f32[32,64], index: 0, kind: input, shape index: {}]
  %s1 = inlined_call_operand.hbm [shape: bf16[64,128], index: 1, kind: input, shape index: {}]
  %s2 = inlined_call_operand.vmem [shape: f32[1,128], index: 2, kind: input, shape index: {}]
  %s3 = inlined_call_operand.hbm [shape: f32[32,128], index: 3, kind: output, shape index: {}]
  %s4 = sld [smem:[#allocation0]]
  $region30: #{tpu_custom_call.1} parent=0
    _
  %s6 = ssub.s32 1, %s4
  %s7 = scalar_select 0, %s6, %s4
  $region1: #{tpu_custom_call.1} parent=0
    #allocation2 [shape = 'u8[16384]{0}', space=vmem, size = 0x4000, scoped, tag = 'input window, operand 0, single buffered']
    #allocation3 [shape = 's32[1]{0}', space=sflag, size = 0x4, scoped, tag = 'scoped memory for tpu_custom_call.1']
    #allocation4 [shape = 's32[1]{0}', space=sflag, size = 0x4, scoped, tag = 'scoped memory for tpu_custom_call.1']
    #allocation5 [shape = 'u8[16384]{0}', space=vmem, size = 0x4000, scoped, tag = 'input window, operand 1, single buffered']
    #allocation6 [shape = 's32[1]{0}', space=sflag, size = 0x4, scoped, tag = 'scoped memory for tpu_custom_call.1']
    #allocation7 [shape = 'u8[16384]{0}', space=vmem, size = 0x4000, scoped, tag = 'output window, operand 0, single buffered']
    %8 = vsyncpa [#allocation3], 0
    %9 = vsyncpa [#allocation6], 0
    %10 = vsyncpa [#allocation4], 0
    // Predicated region
    $region2: #{tpu_custom_call.1} parent=1 // pred_check
      _
    $region3: #{tpu_custom_call.1} parent=1 // pred_check_branch
      %12 = sbr.rel (0) target = $region5
    $region4: #{tpu_custom_call.1} parent=1 // pred_region
      %s14 = ssub.s32 512, 512
      %15 = vsyncadd [#allocation3], %s14
      %s16 = sshll.u32 [#allocation2], 4
      %s17 = int_to_ptr.vmem [resolvable:$true] %s16
      %22 = dma.hbm_to_vmem [thread:$0]  %s0, 512, %s17, [#allocation3], 128, 128, 8
    $region5: #{tpu_custom_call.1} parent=1 // pred_fallthru
      _
    // Predicated region
    $region6: #{tpu_custom_call.1} parent=1 // pred_check
      _
    $region7: #{tpu_custom_call.1} parent=1 // pred_check_branch
      %24 = sbr.rel (0) target = $region9
    $region8: #{tpu_custom_call.1} parent=1 // pred_region
      %s26 = ssub.s32 512, 512
      %27 = vsyncadd [#allocation6], %s26
      %s28 = sshll.u32 [#allocation5], 4
      %s29 = int_to_ptr.vmem [resolvable:$true] %s28
      %34 = dma.hbm_to_vmem [thread:$0]  %s1, 512, %s29, [#allocation6], 64, 64, 4
    $region9: #{tpu_custom_call.1} parent=1 // pred_fallthru
      _
    // Predicated region
    $region10: #{tpu_custom_call.1} parent=1 // pred_check
      _
    $region11: #{tpu_custom_call.1} parent=1 // pred_check_branch
      %36 = sbr.rel (0) target = $region13
    $region12: #{tpu_custom_call.1} parent=1 // pred_region
      _
    $region13: #{tpu_custom_call.1} parent=1 // pred_fallthru
      _
    // Predicated region
    $region14: #{tpu_custom_call.1} parent=1 // pred_check
      _
    $region15: #{tpu_custom_call.1} parent=1 // pred_check_branch
      %38 = sbr.rel (0) target = $region17
    $region16: #{tpu_custom_call.1} parent=1 // pred_region
      %39 = dma.done [#allocation3], 512
    $region17: #{tpu_custom_call.1} parent=1 // pred_fallthru
      _
    // Predicated region
    $region18: #{tpu_custom_call.1} parent=1 // pred_check
      _
    $region19: #{tpu_custom_call.1} parent=1 // pred_check_branch
      %41 = sbr.rel (0) target = $region21
    $region20: #{tpu_custom_call.1} parent=1 // pred_region
      %42 = dma.done [#allocation6], 512
    $region21: #{tpu_custom_call.1} parent=1 // pred_fallthru
      _
    %v44 = vld [vmem:[#allocation2] sm:$0xff]
    %v45 = vld [vmem:[#allocation2 + $0x8] sm:$0xff]
    %v46 = vld [vmem:[#allocation2 + $0x10] sm:$0xff]
    %v47 = vld [vmem:[#allocation2 + $0x18] sm:$0xff]
    %v48 = vpack.c.bf16 %v45, %v44
    %v49 = vpack.c.bf16 %v47, %v46
    %v50 = vld [vmem:[#allocation5] sm:$0xf]
    %v51 = vld [vmem:[#allocation5 + $0x4] sm:$0xf]
    %v52 = vld [vmem:[#allocation5 + $0x8] sm:$0xf]
    %v53 = vld [vmem:[#allocation5 + $0xc] sm:$0xf]
    %v54 = vld [vmem:[#allocation5 + $0x10] sm:$0xf]
    %v55 = vld [vmem:[#allocation5 + $0x14] sm:$0xf]
    %v56 = vld [vmem:[#allocation5 + $0x18] sm:$0xf]
    %v57 = vld [vmem:[#allocation5 + $0x1c] sm:$0xf]
    %v58 = vld [vmem:[%s2] sm:$0x1]
    %v60 = vlaneseq
    %v61 = vshrl.u32 %v60, 7
    %v62 = vsub.s32 0, %v61
    %v63 = vrot.slane %v58, %v62
    %v73 = vunpack.c.l.b16 %v50
    %v74 = vunpack.c.l.b16 %v51
    %v75 = vunpack.c.l.b16 %v52
    %v76 = vunpack.c.l.b16 %v53
    %v77 = vunpack.c.l.b16 %v54
    %v78 = vunpack.c.l.b16 %v55
    %v79 = vunpack.c.l.b16 %v56
    %v80 = vunpack.c.l.b16 %v57
    %v81 = vpack.c.b16 %v74, %v73
    %v82 = vpack.c.b16 %v76, %v75
    %v83 = vpack.c.b16 %v78, %v77
    %v84 = vpack.c.b16 %v80, %v79
    %vm89 = vcmask 523264
    %v91 = vsel %vm89, %v48, 0
    %v94 = vsel %vm89, %v49, 0
    %96 = vmatprep.subr.bf16.mxu0 0
    %97 = vmatpush1.bf16.msra.mxu0 0
    %98 = vmatprep.subr.bf16.mxu0 0
    %99 = vmatpush1.bf16.msra.mxu0 0
    %100 = vmatprep.subr.bf16.mxu0 0
    %101 = vmatpush1.bf16.msra.mxu0 0
    %102 = vmatprep.subr.bf16.mxu0 0
    %103 = vmatpush1.bf16.msra.mxu0 0
    %104 = vmatprep.subr.bf16.mxu0 0
    %105 = vmatpush1.bf16.msra.mxu0 %v84
    %106 = vmatprep.subr.bf16.mxu0 0
    %107 = vmatpush1.bf16.msra.mxu0 %v83
    %108 = vmatprep.subr.bf16.mxu0 0
    %109 = vmatpush1.bf16.msra.mxu0 %v82
    %110 = vmatprep.subr.bf16.mxu0 0
    %111 = vmatpush1.bf16.msra.mxu0 %v81
    %112 = vmatprep.subr.bf16.mxu0 0
    %113 = vmatpush2.bf16.msra.mxu0 0
    %114 = vmatprep.subr.bf16.mxu0 0
    %115 = vmatpush2.bf16.msra.mxu0 0
    %116 = vmatprep.subr.bf16.mxu0 0
    %117 = vmatpush2.bf16.msra.mxu0 0
    %118 = vmatprep.subr.bf16.mxu0 0
    %119 = vmatpush2.bf16.msra.mxu0 0
    %120 = vmatprep.subr.bf16.mxu0 0
    %121 = vmatpush2.bf16.msra.mxu0 0
    %122 = vmatprep.subr.bf16.mxu0 0
    %123 = vmatpush2.bf16.msra.mxu0 0
    %124 = vmatprep.subr.bf16.mxu0 0
    %125 = vmatpush2.bf16.msra.mxu0 0
    %126 = vmatprep.subr.bf16.mxu0 0
    %127 = vmatpush2.bf16.msra.mxu0 0
    %128 = vmatprep.mubr.bf16.mxu0 0
    %129 = vmatmul.mubr.bf16.gmra.mxu0 %v91
    %v130 = vpop.f32.mrf.mxu0
    %v131 = vadd.f32 %v63, %v130
    %v132 = vpop.f32.mrf.mxu0
    %v133 = vpop.f32.mrf.mxu0
    %v134 = vadd.f32 %v63, %v133
    %v135 = vpop.f32.mrf.mxu0
    %136 = vmatprep.mubr.bf16.mxu0 0
    %137 = vmatmul.mubr.bf16.gmra.mxu0 %v94
    %v138 = vpop.f32.mrf.mxu0
    %v139 = vadd.f32 %v63, %v138
    %v140 = vpop.f32.mrf.mxu0
    %v141 = vpop.f32.mrf.mxu0
    %v142 = vadd.f32 %v63, %v141
    %v143 = vpop.f32.mrf.mxu0
    %144 = vdwg.mxu0
    %145 = vst [vmem:[#allocation7] sm:$0xff] %v131
    %146 = vst [vmem:[#allocation7 + $0x8] sm:$0xff] %v134
    %147 = vst [vmem:[#allocation7 + $0x10] sm:$0xff] %v139
    %148 = vst [vmem:[#allocation7 + $0x18] sm:$0xff] %v142
    // Predicated region
    $region22: #{tpu_custom_call.1} parent=1 // pred_check
      _
    $region23: #{tpu_custom_call.1} parent=1 // pred_check_branch
      %150 = sbr.rel (0) target = $region25
    $region24: #{tpu_custom_call.1} parent=1 // pred_region
      %s152 = ssub.s32 512, 512
      %153 = vsyncadd [#allocation4], %s152
      %s154 = sshll.u32 [#allocation7], 4
      %s155 = int_to_ptr.vmem [resolvable:$true] %s154
      %160 = dma.vmem_to_hbm [thread:$0]  %s155, 512, %s3, [#allocation4], 128, 128, 8
    $region25: #{tpu_custom_call.1} parent=1 // pred_fallthru
      _
    // Predicated region
    $region26: #{tpu_custom_call.1} parent=1 // pred_check
      _
    $region27: #{tpu_custom_call.1} parent=1 // pred_check_branch
      %162 = sbr.rel (0) target = $region29
    $region28: #{tpu_custom_call.1} parent=1 // pred_region
      %163 = dma.done [#allocation4], 512
    $region29: #{tpu_custom_call.1} parent=1 // pred_fallthru
      _
    %164 = vsyncpa [#allocation3], 1
    %165 = vsyncpa [#allocation6], 1
    %166 = vsyncpa [#allocation4], 1

</llo_original>
